<compile_context>
chip_gen: v6e
topology: v6e:2x2x1
jax: 0.10.0
libtpu: 0.0.40
codegen_flags: <defaults>
</compile_context>

<pallas_src>
import math

import jax
import jax.numpy as jnp
from jax import lax
from jax.experimental import pallas as pl
from jax.experimental.pallas import tpu as pltpu


def _tokenizer_kernel(off_ref, idx_ref, table_ref, out_ref):
    """One grid step == one batch tile of TB rows.

    off_ref  : SMEM (F,)          int32  category offsets (scalar prefetch)
    idx_ref  : VMEM (TB, F)       int32  raw categorical values for this tile
    table_ref: VMEM (V_pad, F*D)  f32    block-diagonal table, bias folded in
    out_ref  : VMEM (TB, F*D)     f32    lane-dense output tile
    """
    tb, n_features = idx_ref.shape
    v_pad = table_ref.shape[0]

    iota = lax.broadcasted_iota(jnp.int32, (tb, v_pad), 1)        # (TB, V_pad)

    # Multi-hot over the global (per-feature disjoint) vocab axis: exactly one
    # hit per feature block for valid inputs.  F is small and static, so this
    # unrolls to F VPU compares + F-1 adds.
    multihot = None
    for f in range(n_features):
        idx_f = idx_ref[:, f:f + 1] + off_ref[f]                  # (TB, 1)
        hit = (iota == idx_f).astype(jnp.float32)                 # (TB, V_pad)
        multihot = hit if multihot is None else multihot + hit

    # Single MXU pass: (TB, V_pad) @ (V_pad, F*D).  HIGHEST precision keeps
    # the f32 table values exact through the matmul (multi-pass bf16
    # reconstruction); the 0/1 LHS is exact in any MXU input dtype.
    out_ref[...] = jnp.dot(
        multihot, table_ref[...],
        preferred_element_type=jnp.float32,
        precision=lax.Precision.HIGHEST).astype(out_ref.dtype)


def categorical_feature_tokenizer(x, emb, bias, category_offsets, *,
                                  batch_tile=1024):
    """x: (B, F) int categorical values; returns (B, F, D) f32 tokens."""
    B, F = x.shape
    V, D = emb.shape
    FD = F * D

    # Pad the vocab axis to a multiple of 128 (clean MXU K dim; padded rows
    # are zero so any out-of-range index contributes zeros, never OOB reads).
    V_pad = max(128, ((V + 127) // 128) * 128)

    # Block-diagonal table with bias folded in.  Built once per call here; in
    # a real model this is parameter preprocessing and would be cached.
    offsets = category_offsets.astype(jnp.int32)
    vocab_rows = jnp.arange(V, dtype=jnp.int32)
    feat_id = jnp.sum(vocab_rows[:, None] >= offsets[None, :], axis=1) - 1   # (V,)
    col_sel = jax.nn.one_hot(feat_id, F, dtype=emb.dtype)                    # (V, F)
    table = col_sel[:, :, None] * (emb[:, None, :] + bias[None, :, :])       # (V, F, D)
    table_pad = jnp.zeros((V_pad, FD), emb.dtype).at[:V].set(table.reshape(V, FD))

    # --- batch tile selection -------------------------------------------
    # Big enough to amortize the ~0.35 us/step pipeline overhead, small enough
    # to stay inside a conservative VMEM budget (valid for v7x's 64 MiB).
    def vmem_budget(tb):
        return (2 * tb * FD * 4          # output tile, double-buffered
                + 2 * tb * 128 * 4       # (tb, F) idx lane-pads to (tb, 128)
                + 2 * V_pad * FD * 4     # resident table
                + 6 * tb * V_pad * 4)    # iota / multi-hot / matmul temps

    VMEM_SAFE = 40 << 20                 # conservative across v5e/v6e/v7x
    TB = min(batch_tile, B)
    if TB < B:
        TB = max(8, (TB // 8) * 8)       # blocks smaller than B: multiple of 8
    while TB > 8 and TB < B is False and vmem_budget(TB) > VMEM_SAFE:
        break                            # (placeholder removed below)
    while TB > 8 and vmem_budget(TB) > VMEM_SAFE:
        TB = max(8, (TB // 2 // 8) * 8)
    vmem_limit = int(min(max(vmem_budget(TB) + (4 << 20), 16 << 20), 48 << 20))

    grid = (pl.cdiv(B, TB),)             # ragged last tile handled by Pallas

    cost = pl.CostEstimate(
        flops=2 * B * V_pad * FD,
        transcendentals=0,
        bytes_accessed=B * F * 4 + V_pad * FD * 4 + B * FD * 4)

    out_flat = pl.pallas_call(
        _tokenizer_kernel,
        out_shape=jax.ShapeDtypeStruct((B, FD), emb.dtype),
        grid_spec=pltpu.PrefetchScalarGridSpec(
            num_scalar_prefetch=1,                                 # offsets -> SMEM
            grid=grid,
            in_specs=[
                pl.BlockSpec((TB, F), lambda i, off: (i, 0)),      # indices
                pl.BlockSpec((V_pad, FD), lambda i, off: (0, 0)),  # table (resident)
            ],
            out_specs=pl.BlockSpec((TB, FD), lambda i, off: (i, 0)),
        ),
        compiler_params=pltpu.CompilerParams(
            dimension_semantics=("parallel",),   # batch tiles shard across TCs
            vmem_limit_bytes=vmem_limit),
        cost_estimate=cost,
    )(offsets, x.astype(jnp.int32), table_pad)

    return out_flat.reshape(B, F, D)


if __name__ == "__main__":
    # Module configuration (matches CategoricalFeatureTokenizer.__init__).
    cardinalities = [3, 5, 4, 7]     # 4 categorical features
    d_token = 32
    batch = 37                       # deliberately not a multiple of the tile

    vocab = sum(cardinalities)
    n_features = len(cardinalities)
    s = 1.0 / math.sqrt(d_token)     # 'uniform' initialization: U(-s, s)

    key = jax.random.PRNGKey(0)
    k_emb, k_bias, k_x = jax.random.split(key, 3)

    # Deterministic parameter init (synthetic; no checkpoint).
    emb = jax.random.uniform(k_emb, (vocab, d_token), jnp.float32, -s, s)
    bias = jax.random.uniform(k_bias, (n_features, d_token), jnp.float32, -s, s)

    # category_offsets = cumsum([0] + cardinalities[:-1])
    category_offsets = jnp.cumsum(
        jnp.array([0] + cardinalities[:-1], dtype=jnp.int32))

    # Sample valid categorical inputs: x[:, j] in [0, cardinalities[j]).
    cols = []
    for c in cardinalities:
        k_x, sub = jax.random.split(k_x)
        cols.append(jax.random.randint(sub, (batch,), 0, c, dtype=jnp.int32))
    x = jnp.stack(cols, axis=1)      # (batch, n_features) int32

    # Pure-JAX reference of the PyTorch forward.
    ref = emb[x + category_offsets[None, :]] + bias[None]

    # Path 1: multi-step grid with a ragged last tile (TB=16, B=37 -> 3 steps).
    out_tiled = categorical_feature_tokenizer(x, emb, bias, category_offsets,
                                              batch_tile=16)
    out_tiled = jax.block_until_ready(out_tiled)
    assert out_tiled.shape == (batch, n_features, d_token)
    assert out_tiled.dtype == jnp.float32
    assert jnp.allclose(out_tiled, ref, atol=1e-5, rtol=1e-5), \
        "mismatch vs reference (tiled path)"

    # Path 2: default (large) tile -> single full-batch block.
    out_full = categorical_feature_tokenizer(x, emb, bias, category_offsets)
    out_full = jax.block_until_ready(out_full)
    assert jnp.allclose(out_full, ref, atol=1e-5, rtol=1e-5), \
        "mismatch vs reference (full-tile path)"

    print("KERNEL_OK")
</pallas_src>

<mosaic_0001>
module attributes {stable_mosaic.version = 11 : i64} {
  func.func @_tokenizer_kernel(%arg0: i32, %arg1: memref<4xi32, #tpu.memory_space<smem>>, %arg2: memref<16x4xi32, #tpu.memory_space<vmem>>, %arg3: memref<128x128xf32, #tpu.memory_space<vmem>>, %arg4: memref<16x128xf32, #tpu.memory_space<vmem>>) attributes {dimension_semantics = [#tpu.dimension_semantics<parallel>], iteration_bounds = array<i64: 3>, scalar_prefetch = 1 : i64, scratch_operands = 0 : i64, tpu.core_type = #tpu.core_type<tc>, window_params = [{transform_indices = @transform_0, window_bounds = array<i64: 16, 4>}, {pipeline_mode = #tpu.pipeline_mode<synchronous>, transform_indices = @transform_1, window_bounds = array<i64: 128, 128>}, {transform_indices = @transform_2, window_bounds = array<i64: 16, 128>}]} {
    %0 = tpu.iota {dimensions = array<i32: 1>} : vector<16x128xi32>
    %c0 = arith.constant 0 : index
    %c0_0 = arith.constant 0 : index
    %1 = vector.load %arg2[%c0, %c0_0] : memref<16x4xi32, #tpu.memory_space<vmem>>, vector<16x1xi32>
    %c0_1 = arith.constant 0 : index
    %2 = memref.load %arg1[%c0_1] : memref<4xi32, #tpu.memory_space<smem>>
    %3 = vector.broadcast %2 : i32 to vector<16x1xi32>
    %4 = arith.addi %1, %3 : vector<16x1xi32>
    %5 = vector.broadcast %4 : vector<16x1xi32> to vector<16x128xi32>
    %6 = arith.cmpi eq, %0, %5 : vector<16x128xi32>
    %7 = arith.extui %6 : vector<16x128xi1> to vector<16x128xi32>
    %8 = arith.sitofp %7 : vector<16x128xi32> to vector<16x128xf32>
    %c0_2 = arith.constant 0 : index
    %c1 = arith.constant 1 : index
    %9 = vector.load %arg2[%c0_2, %c1] : memref<16x4xi32, #tpu.memory_space<vmem>>, vector<16x1xi32>
    %c1_3 = arith.constant 1 : index
    %10 = memref.load %arg1[%c1_3] : memref<4xi32, #tpu.memory_space<smem>>
    %11 = vector.broadcast %10 : i32 to vector<16x1xi32>
    %12 = arith.addi %9, %11 : vector<16x1xi32>
    %13 = vector.broadcast %12 : vector<16x1xi32> to vector<16x128xi32>
    %14 = arith.cmpi eq, %0, %13 : vector<16x128xi32>
    %15 = arith.extui %14 : vector<16x128xi1> to vector<16x128xi32>
    %16 = arith.sitofp %15 : vector<16x128xi32> to vector<16x128xf32>
    %17 = arith.addf %8, %16 : vector<16x128xf32>
    %c0_4 = arith.constant 0 : index
    %c2 = arith.constant 2 : index
    %18 = vector.load %arg2[%c0_4, %c2] : memref<16x4xi32, #tpu.memory_space<vmem>>, vector<16x1xi32>
    %c2_5 = arith.constant 2 : index
    %19 = memref.load %arg1[%c2_5] : memref<4xi32, #tpu.memory_space<smem>>
    %20 = vector.broadcast %19 : i32 to vector<16x1xi32>
    %21 = arith.addi %18, %20 : vector<16x1xi32>
    %22 = vector.broadcast %21 : vector<16x1xi32> to vector<16x128xi32>
    %23 = arith.cmpi eq, %0, %22 : vector<16x128xi32>
    %24 = arith.extui %23 : vector<16x128xi1> to vector<16x128xi32>
    %25 = arith.sitofp %24 : vector<16x128xi32> to vector<16x128xf32>
    %26 = arith.addf %17, %25 : vector<16x128xf32>
    %c0_6 = arith.constant 0 : index
    %c3 = arith.constant 3 : index
    %27 = vector.load %arg2[%c0_6, %c3] : memref<16x4xi32, #tpu.memory_space<vmem>>, vector<16x1xi32>
    %c3_7 = arith.constant 3 : index
    %28 = memref.load %arg1[%c3_7] : memref<4xi32, #tpu.memory_space<smem>>
    %29 = vector.broadcast %28 : i32 to vector<16x1xi32>
    %30 = arith.addi %27, %29 : vector<16x1xi32>
    %31 = vector.broadcast %30 : vector<16x1xi32> to vector<16x128xi32>
    %32 = arith.cmpi eq, %0, %31 : vector<16x128xi32>
    %33 = arith.extui %32 : vector<16x128xi1> to vector<16x128xi32>
    %34 = arith.sitofp %33 : vector<16x128xi32> to vector<16x128xf32>
    %35 = arith.addf %26, %34 : vector<16x128xf32>
    %c0_8 = arith.constant 0 : index
    %c0_9 = arith.constant 0 : index
    %36 = vector.load %arg3[%c0_8, %c0_9] : memref<128x128xf32, #tpu.memory_space<vmem>>, vector<128x128xf32>
    %cst = arith.constant dense<0.000000e+00> : vector<16x128xf32>
    %37 = tpu.matmul %35, %36, %cst {dimension_numbers = #tpu.dot_dimension_numbers<[1], [0], [0], [1], [0, 0, 1, 1], [], []>, precision = #tpu.contract_precision<fp32>} : vector<16x128xf32>, vector<128x128xf32>, vector<16x128xf32> -> vector<16x128xf32>
    %c0_10 = arith.constant 0 : index
    %c0_11 = arith.constant 0 : index
    %38 = vector.load %arg4[%c0_10, %c0_11] : memref<16x128xf32, #tpu.memory_space<vmem>>, vector<16x128xf32>
    tpu.vector_store %arg4[%c0_10, %c0_11], %37 {strides = array<i32>} : memref<16x128xf32, #tpu.memory_space<vmem>>, vector<16x128xf32>,
    return
  }
  func.func @transform_0(%arg0: i32, %arg1: memref<4xi32, #tpu.memory_space<smem>>) -> (i32, i32) {
    %c0_i32 = arith.constant 0 : i32
    %c0_i32_0 = arith.constant 0 : i32
    return %arg0, %c0_i32 : i32, i32
  }
  func.func @transform_1(%arg0: i32, %arg1: memref<4xi32, #tpu.memory_space<smem>>) -> (i32, i32) {
    %c0_i32 = arith.constant 0 : i32
    %c0_i32_0 = arith.constant 0 : i32
    %c0_i32_1 = arith.constant 0 : i32
    return %c0_i32, %c0_i32_0 : i32, i32
  }
  func.func @transform_2(%arg0: i32, %arg1: memref<4xi32, #tpu.memory_space<smem>>) -> (i32, i32) {
    %c0_i32 = arith.constant 0 : i32
    %c0_i32_0 = arith.constant 0 : i32
    return %arg0, %c0_i32 : i32, i32
  }
}

</mosaic_0001>

<llo_original>
// kernel: tpu_custom_call.1
$region0: #{tpu_custom_call.1}
  #allocation0 [shape = 'u32[]', space=smem, size = 0x4, offset = 0x4, fixed_abs, tag = 'smem constant byte address 0x4 - core index']
  #allocation1 [shape = 'u32[144,128]{1,0:T(1,128)}', space=vmem, size = 0x12000, scoped, tag = 'internal scratch']
  #allocation2 [shape = 's32[1]{0}', space=sflag, size = 0x4, scoped, tag = 'scoped memory for tpu_custom_call.1']
  #allocation3 [shape = 'u8[512]{0}', space=smem, size = 0x200, scoped, tag = 'prefetched SMEM operand 0']
  %s0 = inlined_call_operand.vmem [shape: s32[4], index: 0, kind: input, shape index: {}]
  %s1 = inlined_call_operand.vmem [shape: s32[37,4], index: 1, kind: input, shape index: {}]
  %s2 = inlined_call_operand.hbm [shape: f32[128,128], index: 2, kind: input, shape index: {}]
  %s3 = inlined_call_operand.hbm [shape: f32[37,128], index: 3, kind: output, shape index: {}]
  %s4 = sld [smem:[#allocation0]]
  $region45: #{tpu_custom_call.1} parent=0
    _
  %s6 = ssub.s32 1, %s4
  %s7 = scalar_select 0, %s6, %s4
  %s8 = sshll.u32 %s0, 4
  %s9 = int_to_ptr.vmem [resolvable:$true] %s8
  %11 = dma.vmem_to_smem %s9, 16, [#allocation3], [#allocation2]
  %12 = dma.done [#allocation2], 16
  %13 = sfence
  $region1: #{tpu_custom_call.1} parent=0
    #allocation4 [shape = 'u8[65536]{0}', space=vmem, size = 0x10000, scoped, tag = 'input window, operand 2, single buffered']
    #allocation5 [shape = 's32[2]{0}', space=sflag, size = 0x8, scoped, tag = 'scoped memory for tpu_custom_call.1']
    #allocation6 [shape = 's32[2]{0}', space=sflag, size = 0x8, scoped, tag = 'scoped memory for tpu_custom_call.1']
    #allocation7 [shape = 'u8[16384]{0}', space=vmem, size = 0x4000, scoped, tag = 'output window, operand 0']
    %14 = vsyncpa [#allocation5], 0
    %15 = vsyncpa [#allocation6], 0
    %s16 = scalar_lea.sflag [#allocation6], 1
    %17 = vsyncpa %s16, 0
    loop: start=0, step=1, limit=5
    $region2: #{tpu_custom_call.1} parent=1 // loop_pre_header
      _
    $region3: #{tpu_custom_call.1} parent=1 // loop_header
      %s19 = sphi 0, %s23
      %p20 = scmp.ge.s32.totalorder %s19, 5
      %s29 = sphi 0, %s31
      %s32 = sphi 0, %s29
      %s33 = sphi 0, %s32
      %s49 = sphi 0, %s33
      %s53 = sphi 0, %s53
      %s55 = sphi 0, %s53
      %s56 = sphi 0, %s55
      %s70 = sphi 0, %s56
      %s76 = sphi 0, %s78
      %s79 = sphi 0, %s76
      %s80 = sphi 0, %s79
      %s96 = sphi 0, %s80
    $region4: #{tpu_custom_call.1} parent=1 // loop_header_branch
      %22 = sbr.rel (%p20) target = $region8
    $region5: #{tpu_custom_call.1} parent=1 // loop_body
      %s24 = ssub.s32 %s19, 1
      %s25 = ssub.s32 %s19, 2
      %s26 = sadd.s32 %s19, 1
      %s27 = ssub.s32 %s19, %s26
      %p28 = scmp.eq.s32.totalorder %s27, 0
      %s30 = sadd.s32 %s29, 1
      %s31 = scalar_select %p28, %s29, %s30
      %p34 = pneg %p28
      %p35 = scmp.eq.s32.totalorder %s19, 2
      %p36 = por %p34, %p35
      %p37 = scmp.ne.s32.totalorder %s29, %s32
      %p38 = scmp.eq.s32.totalorder %s19, 0
      %p39 = por %p37, %p38
      %p40 = scmp.ne.s32.totalorder %s29, %s32
      %p41 = scmp.eq.s32.totalorder %s24, 2
      %p42 = por %p40, %p41
      %p43 = scmp.ne.s32.totalorder %s32, %s33
      %p44 = scmp.eq.s32.totalorder %s24, 0
      %p45 = por %p43, %p44
      %p46 = scmp.ne.s32.totalorder %s32, %s33
      %p47 = scmp.eq.s32.totalorder %s25, 2
      %p48 = por %p46, %p47
      %p50 = scmp.ne.s32.totalorder %s33, %s49
      %p51 = scmp.eq.s32.totalorder %s25, 0
      %p52 = por %p50, %p51
      %s54 = sadd.s32 %s53, 1
      %p57 = scmp.eq.s32.totalorder %s19, 2
      %p58 = scmp.ne.s32.totalorder %s53, %s55
      %p59 = scmp.eq.s32.totalorder %s19, 0
      %p60 = por %p58, %p59
      %p61 = scmp.ne.s32.totalorder %s53, %s55
      %p62 = scmp.eq.s32.totalorder %s24, 2
      %p63 = por %p61, %p62
      %p64 = scmp.ne.s32.totalorder %s55, %s56
      %p65 = scmp.eq.s32.totalorder %s24, 0
      %p66 = por %p64, %p65
      %p67 = scmp.ne.s32.totalorder %s55, %s56
      %p68 = scmp.eq.s32.totalorder %s25, 2
      %p69 = por %p67, %p68
      %p71 = scmp.ne.s32.totalorder %s56, %s70
      %p72 = scmp.eq.s32.totalorder %s25, 0
      %p73 = por %p71, %p72
      %s74 = ssub.s32 %s19, %s26
      %p75 = scmp.eq.s32.totalorder %s74, 0
      %s77 = sadd.s32 %s76, 1
      %s78 = scalar_select %p75, %s76, %s77
      %p81 = pneg %p75
      %p82 = scmp.eq.s32.totalorder %s19, 2
      %p83 = por %p81, %p82
      %p84 = scmp.ne.s32.totalorder %s76, %s79
      %p85 = scmp.eq.s32.totalorder %s19, 0
      %p86 = por %p84, %p85
      %p87 = scmp.ne.s32.totalorder %s76, %s79
      %p88 = scmp.eq.s32.totalorder %s24, 2
      %p89 = por %p87, %p88
      %p90 = scmp.ne.s32.totalorder %s79, %s80
      %p91 = scmp.eq.s32.totalorder %s24, 0
      %p92 = por %p90, %p91
      %p93 = scmp.ne.s32.totalorder %s79, %s80
      %p94 = scmp.eq.s32.totalorder %s25, 2
      %p95 = por %p93, %p94
      %p97 = scmp.ne.s32.totalorder %s80, %s96
      %p98 = scmp.eq.s32.totalorder %s25, 0
      %p99 = por %p97, %p98
      %p100 = scmp.le.s32.totalorder 1, %s19
      %p101 = scmp.lt.s32.totalorder %s19, 4
      %p102 = pnand %p100, %p101
      %p103 = pneg %p102
      // Predicated region
      $region9: #{tpu_custom_call.1} parent=5 // pred_check
        _
      $region10: #{tpu_custom_call.1} parent=5 // pred_check_branch
        %105 = sbr.rel (%p102) target = $region12
      $region11: #{tpu_custom_call.1} parent=5 // pred_region
        %s106 = ssub.s32 %s19, 1
        // Predicated region
        $region13: #{tpu_custom_call.1} parent=11 // pred_check
          %p107 = pneg %p66
        $region14: #{tpu_custom_call.1} parent=11 // pred_check_branch
          %109 = sbr.rel (%p107) target = $region16
        $region15: #{tpu_custom_call.1} parent=11 // pred_region
          %s111 = ssub.s32 2048, 2048
          %112 = vsyncadd [#allocation5], %s111
          %s113 = sshll.u32 [#allocation4], 4
          %s114 = int_to_ptr.vmem [resolvable:$true] %s113
          %119 = dma.hbm_to_vmem [thread:$0]  %s2, 2048, %s114, [#allocation5], 128, 128, 8
        $region16: #{tpu_custom_call.1} parent=11 // pred_fallthru
          _
      $region12: #{tpu_custom_call.1} parent=5 // pred_fallthru
        _
      %p120 = scmp.lt.s32.totalorder %s19, 3
      // Predicated region
      $region17: #{tpu_custom_call.1} parent=5 // pred_check
        %p121 = pneg %p120
      $region18: #{tpu_custom_call.1} parent=5 // pred_check_branch
        %123 = sbr.rel (%p121) target = $region20
      $region19: #{tpu_custom_call.1} parent=5 // pred_region
        // Predicated region
        $region21: #{tpu_custom_call.1} parent=19 // pred_check
          %p124 = pneg %p39
        $region22: #{tpu_custom_call.1} parent=19 // pred_check_branch
          %126 = sbr.rel (%p124) target = $region24
        $region23: #{tpu_custom_call.1} parent=19 // pred_region
          %s127 = smul.u32 2, %s19
          %s128 = ssub.s32 5, %s127
          %p129 = scmp.lt.s32.totalorder %s128, 2
          %s130 = scalar_select %p129, %s128, 2
          %s131 = smul.u32 128, %s130
          %p132 = scmp.lt.s32.totalorder %s127, 4
          %s133 = scalar_select %p132, %s127, 4
          %s134 = smul.addr %s133, 8
          %s135 = scalar_lea.vmem %s1, %s134
          %s136 = smul.u32 2, %s19
          %s137 = ssub.s32 5, %s136
          %p138 = scmp.lt.s32.totalorder %s137, 2
          %s139 = scalar_select %p138, %s137, 2
          %s140 = smul.u32 128, %s139
        $region24: #{tpu_custom_call.1} parent=19 // pred_fallthru
          _
      $region20: #{tpu_custom_call.1} parent=5 // pred_fallthru
        _
      %p141 = scmp.le.s32.totalorder 1, %s19
      %p142 = scmp.lt.s32.totalorder %s19, 4
      %p143 = pnand %p141, %p142
      %p144 = pneg %p143
      // Predicated region
      $region25: #{tpu_custom_call.1} parent=5 // pred_check
        _
      $region26: #{tpu_custom_call.1} parent=5 // pred_check_branch
        %146 = sbr.rel (%p143) target = $region28
      $region27: #{tpu_custom_call.1} parent=5 // pred_region
        %s147 = ssub.s32 %s19, 1
        // Predicated region
        $region29: #{tpu_custom_call.1} parent=27 // pred_check
          %p148 = pneg %p66
        $region30: #{tpu_custom_call.1} parent=27 // pred_check_branch
          %150 = sbr.rel (%p148) target = $region32
        $region31: #{tpu_custom_call.1} parent=27 // pred_region
          %151 = dma.done [#allocation5], 2048
        $region32: #{tpu_custom_call.1} parent=27 // pred_fallthru
          _
        %s152 = smul.u32 2, %s24
        %s153 = ssub.s32 5, %s152
        %p154 = scmp.lt.s32.totalorder %s153, 2
        %s155 = scalar_select %p154, %s153, 2
        %s156 = smul.u32 128, %s155
        %p157 = scmp.lt.s32.totalorder %s152, 4
        %s158 = scalar_select %p157, %s152, 4
        %s159 = smul.addr %s158, 8
        %s160 = scalar_lea.vmem %s1, %s159
        %p161 = pneg %p45
        %p162 = pneg %p42
        %p163 = pneg %p66
        %p164 = pneg %p63
        %p165 = pneg %p92
        %p166 = pneg %p89
        %s167 = sand.u32 %s79, 1
        %s168 = scalar_lea.sflag [#allocation6], %s167
        %s169 = sand.u32 %s79, 1
        %s170 = smul.addr %s169, 16
        %s171 = scalar_lea.vmem [#allocation7], %s170
        %s172 = smul.u32 2, %s24
        %s173 = ssub.s32 5, %s172
        %p174 = scmp.lt.s32.totalorder %s173, 2
        %s175 = scalar_select %p174, %s173, 2
        %s176 = smul.u32 128, %s175
        %p177 = scmp.lt.s32.totalorder %s172, 4
        %s178 = scalar_select %p177, %s172, 4
        %s179 = smul.addr %s178, 8
        %s180 = scalar_lea.vmem %s1, %s179
        %s181 = smul.u32 2, %s24
        %s182 = ssub.s32 5, %s181
        %p183 = scmp.lt.s32.totalorder %s182, 2
        %s184 = scalar_select %p183, %s182, 2
        %s185 = smul.u32 128, %s184
        %s186 = smul.u32 2, %s24
        %s187 = ssub.s32 5, %s186
        %p188 = scmp.lt.s32.totalorder %s187, 2
        %s189 = scalar_select %p188, %s187, 2
        %s190 = smul.u32 128, %s189
        %v191 = vlaneseq
        %v192 = vand.u32 %v191, 127
        %v193 = vld [vmem:[%s180] sm:$0xff]
        %v194 = vld [vmem:[%s180 + $0x8] sm:$0xff]
        %s195 = sld [smem:[#allocation3]]
        %v196 = vstv %s195
        %v197 = vadd.s32 %v193, %v196
        %v198 = vadd.s32 %v194, %v196
        %199 = vset.pattern.permute.xlu0 0
        %200 = vperm.xlu0 %199, %v197
        %v201 = vpop.permute.xlu0 %200
        %202 = vset.pattern.permute.xlu0 0
        %203 = vperm.xlu0 %202, %v198
        %v204 = vpop.permute.xlu0 %203
        %vm205 = vcmp.eq.s32.totalorder %v192, %v201
        %vm206 = vcmp.eq.s32.totalorder %v192, %v204
        %v207 = vsel %vm205, 1, 0
        %v208 = vsel %vm206, 1, 0
        %v209 = vcvt.s32.f32 %v207
        %v210 = vcvt.s32.f32 %v208
        %s211 = sld [smem:[#allocation3 + $0x1]]
        %v212 = vstv %s211
        %v213 = vadd.s32 %v193, %v212
        %v214 = vadd.s32 %v194, %v212
        %215 = vset.pattern.permute.xlu0 1
        %216 = vperm.xlu0 %215, %v213
        %v217 = vpop.permute.xlu0 %216
        %218 = vset.pattern.permute.xlu0 1
        %219 = vperm.xlu0 %218, %v214
        %v220 = vpop.permute.xlu0 %219
        %vm221 = vcmp.eq.s32.totalorder %v192, %v217
        %vm222 = vcmp.eq.s32.totalorder %v192, %v220
        %v223 = vsel %vm221, 1, 0
        %v224 = vsel %vm222, 1, 0
        %v225 = vcvt.s32.f32 %v223
        %v226 = vcvt.s32.f32 %v224
        %v227 = vadd.f32 %v209, %v225
        %v228 = vadd.f32 %v210, %v226
        %s229 = sld [smem:[#allocation3 + $0x2]]
        %v230 = vstv %s229
        %v231 = vadd.s32 %v193, %v230
        %v232 = vadd.s32 %v194, %v230
        %233 = vset.pattern.permute.xlu0 2
        %234 = vperm.xlu0 %233, %v231
        %v235 = vpop.permute.xlu0 %234
        %236 = vset.pattern.permute.xlu0 2
        %237 = vperm.xlu0 %236, %v232
        %v238 = vpop.permute.xlu0 %237
        %vm239 = vcmp.eq.s32.totalorder %v192, %v235
        %vm240 = vcmp.eq.s32.totalorder %v192, %v238
        %v241 = vsel %vm239, 1, 0
        %v242 = vsel %vm240, 1, 0
        %v243 = vcvt.s32.f32 %v241
        %v244 = vcvt.s32.f32 %v242
        %v245 = vadd.f32 %v227, %v243
        %v246 = vadd.f32 %v228, %v244
        %s247 = sld [smem:[#allocation3 + $0x3]]
        %v248 = vstv %s247
        %v249 = vadd.s32 %v193, %v248
        %v250 = vadd.s32 %v194, %v248
        %251 = vset.pattern.permute.xlu0 3
        %252 = vperm.xlu0 %251, %v249
        %v253 = vpop.permute.xlu0 %252
        %254 = vset.pattern.permute.xlu0 3
        %255 = vperm.xlu0 %254, %v250
        %v256 = vpop.permute.xlu0 %255
        %vm257 = vcmp.eq.s32.totalorder %v192, %v253
        %vm258 = vcmp.eq.s32.totalorder %v192, %v256
        %v259 = vsel %vm257, 1, 0
        %v260 = vsel %vm258, 1, 0
        %v261 = vcvt.s32.f32 %v259
        %v262 = vcvt.s32.f32 %v260
        %v263 = vadd.f32 %v245, %v261
        %v264 = vadd.f32 %v246, %v262
        %v265 = vld [vmem:[#allocation4] sm:$0xff]
        %v266 = vld [vmem:[#allocation4 + $0x8] sm:$0xff]
        %v267 = vld [vmem:[#allocation4 + $0x10] sm:$0xff]
        %v268 = vld [vmem:[#allocation4 + $0x18] sm:$0xff]
        %v269 = vld [vmem:[#allocation4 + $0x20] sm:$0xff]
        %v270 = vld [vmem:[#allocation4 + $0x28] sm:$0xff]
        %v271 = vld [vmem:[#allocation4 + $0x30] sm:$0xff]
        %v272 = vld [vmem:[#allocation4 + $0x38] sm:$0xff]
        %v273 = vld [vmem:[#allocation4 + $0x40] sm:$0xff]
        %v274 = vld [vmem:[#allocation4 + $0x48] sm:$0xff]
        %v275 = vld [vmem:[#allocation4 + $0x50] sm:$0xff]
        %v276 = vld [vmem:[#allocation4 + $0x58] sm:$0xff]
        %v277 = vld [vmem:[#allocation4 + $0x60] sm:$0xff]
        %v278 = vld [vmem:[#allocation4 + $0x68] sm:$0xff]
        %v279 = vld [vmem:[#allocation4 + $0x70] sm:$0xff]
        %v280 = vld [vmem:[#allocation4 + $0x78] sm:$0xff]
        %281 = vmatprep.subr.mxu0 0.0
        %v282 = vand.u32 %v280, 4294901760
        %283 = vmatpush1.msra.mxu0 %v282
        %284 = vmatprep.subr.mxu0 0.0
        %v285 = vand.u32 %v279, 4294901760
        %286 = vmatpush1.msra.mxu0 %v285
        %287 = vmatprep.subr.mxu0 0.0
        %v288 = vand.u32 %v278, 4294901760
        %289 = vmatpush1.msra.mxu0 %v288
        %290 = vmatprep.subr.mxu0 0.0
        %v291 = vand.u32 %v277, 4294901760
        %292 = vmatpush1.msra.mxu0 %v291
        %293 = vmatprep.subr.mxu0 0.0
        %v294 = vand.u32 %v276, 4294901760
        %295 = vmatpush1.msra.mxu0 %v294
        %296 = vmatprep.subr.mxu0 0.0
        %v297 = vand.u32 %v275, 4294901760
        %298 = vmatpush1.msra.mxu0 %v297
        %299 = vmatprep.subr.mxu0 0.0
        %v300 = vand.u32 %v274, 4294901760
        %301 = vmatpush1.msra.mxu0 %v300
        %302 = vmatprep.subr.mxu0 0.0
        %v303 = vand.u32 %v273, 4294901760
        %304 = vmatpush1.msra.mxu0 %v303
        %305 = vmatprep.subr.mxu0 0.0
        %v306 = vand.u32 %v272, 4294901760
        %307 = vmatpush1.msra.mxu0 %v306
        %308 = vmatprep.subr.mxu0 0.0
        %v309 = vand.u32 %v271, 4294901760
        %310 = vmatpush1.msra.mxu0 %v309
        %311 = vmatprep.subr.mxu0 0.0
        %v312 = vand.u32 %v270, 4294901760
        %313 = vmatpush1.msra.mxu0 %v312
        %314 = vmatprep.subr.mxu0 0.0
        %v315 = vand.u32 %v269, 4294901760
        %316 = vmatpush1.msra.mxu0 %v315
        %317 = vmatprep.subr.mxu0 0.0
        %v318 = vand.u32 %v268, 4294901760
        %319 = vmatpush1.msra.mxu0 %v318
        %320 = vmatprep.subr.mxu0 0.0
        %v321 = vand.u32 %v267, 4294901760
        %322 = vmatpush1.msra.mxu0 %v321
        %323 = vmatprep.subr.mxu0 0.0
        %v324 = vand.u32 %v266, 4294901760
        %325 = vmatpush1.msra.mxu0 %v324
        %326 = vmatprep.subr.mxu0 0.0
        %v327 = vand.u32 %v265, 4294901760
        %328 = vmatpush1.msra.mxu0 %v327
        %329 = vmatprep.subr.mxu0 0.0
        %330 = vmatpush2.msra.mxu0 0.0
        %331 = vmatprep.subr.mxu0 0.0
        %332 = vmatpush2.msra.mxu0 0.0
        %333 = vmatprep.subr.mxu0 0.0
        %334 = vmatpush2.msra.mxu0 0.0
        %335 = vmatprep.subr.mxu0 0.0
        %336 = vmatpush2.msra.mxu0 0.0
        %337 = vmatprep.subr.mxu0 0.0
        %338 = vmatpush2.msra.mxu0 0.0
        %339 = vmatprep.subr.mxu0 0.0
        %340 = vmatpush2.msra.mxu0 0.0
        %341 = vmatprep.subr.mxu0 0.0
        %342 = vmatpush2.msra.mxu0 0.0
        %343 = vmatprep.subr.mxu0 0.0
        %344 = vmatpush2.msra.mxu0 0.0
        %345 = vmatprep.subr.mxu0 0.0
        %346 = vmatpush2.msra.mxu0 0.0
        %347 = vmatprep.subr.mxu0 0.0
        %348 = vmatpush2.msra.mxu0 0.0
        %349 = vmatprep.subr.mxu0 0.0
        %350 = vmatpush2.msra.mxu0 0.0
        %351 = vmatprep.subr.mxu0 0.0
        %352 = vmatpush2.msra.mxu0 0.0
        %353 = vmatprep.subr.mxu0 0.0
        %354 = vmatpush2.msra.mxu0 0.0
        %355 = vmatprep.subr.mxu0 0.0
        %356 = vmatpush2.msra.mxu0 0.0
        %357 = vmatprep.subr.mxu0 0.0
        %358 = vmatpush2.msra.mxu0 0.0
        %359 = vmatprep.subr.mxu0 0.0
        %360 = vmatpush2.msra.mxu0 0.0
        %361 = vmatprep.mubr.f32.mxu0 0.0
        %v362 = vand.u32 %v263, 4294901760
        %v363 = vsub.f32 %v263, %v362
        %v364 = vand.u32 %v363, 4294901760
        %v365 = vsub.f32 %v363, %v364
        %v366 = vand.u32 %v365, 4294901760
        %367 = vmatmul.mubr.f32.gmra.mxu0 %v366
        %v368 = vpop.f32.mrf.mxu0
        %v369 = vadd.f32 0.0, %v368
        %v370 = vpop.f32.mrf.mxu0
        %371 = vmatprep.mubr.f32.mxu0 0.0
        %v372 = vand.u32 %v264, 4294901760
        %v373 = vsub.f32 %v264, %v372
        %v374 = vand.u32 %v373, 4294901760
        %v375 = vsub.f32 %v373, %v374
        %v376 = vand.u32 %v375, 4294901760
        %377 = vmatmul.mubr.f32.gmra.mxu0 %v376
        %v378 = vpop.f32.mrf.mxu0
        %v379 = vadd.f32 0.0, %v378
        %v380 = vpop.f32.mrf.mxu0
        %381 = vdwg.mxu0
        %382 = vmatprep.subr.mxu0 0.0
        %v383 = vand.u32 %v280, 4294901760
        %v384 = vsub.f32 %v280, %v383
        %v385 = vand.u32 %v384, 4294901760
        %v386 = vsub.f32 %v384, %v385
        %v387 = vand.u32 %v386, 4294901760
        %388 = vmatpush1.msra.mxu0 %v387
        %389 = vmatprep.subr.mxu0 0.0
        %v390 = vand.u32 %v279, 4294901760
        %v391 = vsub.f32 %v279, %v390
        %v392 = vand.u32 %v391, 4294901760
        %v393 = vsub.f32 %v391, %v392
        %v394 = vand.u32 %v393, 4294901760
        %395 = vmatpush1.msra.mxu0 %v394
        %396 = vmatprep.subr.mxu0 0.0
        %v397 = vand.u32 %v278, 4294901760
        %v398 = vsub.f32 %v278, %v397
        %v399 = vand.u32 %v398, 4294901760
        %v400 = vsub.f32 %v398, %v399
        %v401 = vand.u32 %v400, 4294901760
        %402 = vmatpush1.msra.mxu0 %v401
        %403 = vmatprep.subr.mxu0 0.0
        %v404 = vand.u32 %v277, 4294901760
        %v405 = vsub.f32 %v277, %v404
        %v406 = vand.u32 %v405, 4294901760
        %v407 = vsub.f32 %v405, %v406
        %v408 = vand.u32 %v407, 4294901760
        %409 = vmatpush1.msra.mxu0 %v408
        %410 = vmatprep.subr.mxu0 0.0
        %v411 = vand.u32 %v276, 4294901760
        %v412 = vsub.f32 %v276, %v411
        %v413 = vand.u32 %v412, 4294901760
        %v414 = vsub.f32 %v412, %v413
        %v415 = vand.u32 %v414, 4294901760
        %416 = vmatpush1.msra.mxu0 %v415
        %417 = vmatprep.subr.mxu0 0.0
        %v418 = vand.u32 %v275, 4294901760
        %v419 = vsub.f32 %v275, %v418
        %v420 = vand.u32 %v419, 4294901760
        %v421 = vsub.f32 %v419, %v420
        %v422 = vand.u32 %v421, 4294901760
        %423 = vmatpush1.msra.mxu0 %v422
        %424 = vmatprep.subr.mxu0 0.0
        %v425 = vand.u32 %v274, 4294901760
        %v426 = vsub.f32 %v274, %v425
        %v427 = vand.u32 %v426, 4294901760
        %v428 = vsub.f32 %v426, %v427
        %v429 = vand.u32 %v428, 4294901760
        %430 = vmatpush1.msra.mxu0 %v429
        %431 = vmatprep.subr.mxu0 0.0
        %v432 = vand.u32 %v273, 4294901760
        %v433 = vsub.f32 %v273, %v432
        %v434 = vand.u32 %v433, 4294901760
        %v435 = vsub.f32 %v433, %v434
        %v436 = vand.u32 %v435, 4294901760
        %437 = vmatpush1.msra.mxu0 %v436
        %438 = vmatprep.subr.mxu0 0.0
        %v439 = vand.u32 %v272, 4294901760
        %v440 = vsub.f32 %v272, %v439
        %v441 = vand.u32 %v440, 4294901760
        %v442 = vsub.f32 %v440, %v441
        %v443 = vand.u32 %v442, 4294901760
        %444 = vmatpush1.msra.mxu0 %v443
        %445 = vmatprep.subr.mxu0 0.0
        %v446 = vand.u32 %v271, 4294901760
        %v447 = vsub.f32 %v271, %v446
        %v448 = vand.u32 %v447, 4294901760
        %v449 = vsub.f32 %v447, %v448
        %v450 = vand.u32 %v449, 4294901760
        %451 = vmatpush1.msra.mxu0 %v450
        %452 = vmatprep.subr.mxu0 0.0
        %v453 = vand.u32 %v270, 4294901760
        %v454 = vsub.f32 %v270, %v453
        %v455 = vand.u32 %v454, 4294901760
        %v456 = vsub.f32 %v454, %v455
        %v457 = vand.u32 %v456, 4294901760
        %458 = vmatpush1.msra.mxu0 %v457
        %459 = vmatprep.subr.mxu0 0.0
        %v460 = vand.u32 %v269, 4294901760
        %v461 = vsub.f32 %v269, %v460
        %v462 = vand.u32 %v461, 4294901760
        %v463 = vsub.f32 %v461, %v462
        %v464 = vand.u32 %v463, 4294901760
        %465 = vmatpush1.msra.mxu0 %v464
        %466 = vmatprep.subr.mxu0 0.0
        %v467 = vand.u32 %v268, 4294901760
        %v468 = vsub.f32 %v268, %v467
        %v469 = vand.u32 %v468, 4294901760
        %v470 = vsub.f32 %v468, %v469
        %v471 = vand.u32 %v470, 4294901760
        %472 = vmatpush1.msra.mxu0 %v471
        %473 = vmatprep.subr.mxu0 0.0
        %v474 = vand.u32 %v267, 4294901760
        %v475 = vsub.f32 %v267, %v474
        %v476 = vand.u32 %v475, 4294901760
        %v477 = vsub.f32 %v475, %v476
        %v478 = vand.u32 %v477, 4294901760
        %479 = vmatpush1.msra.mxu0 %v478
        %480 = vmatprep.subr.mxu0 0.0
        %v481 = vand.u32 %v266, 4294901760
        %v482 = vsub.f32 %v266, %v481
        %v483 = vand.u32 %v482, 4294901760
        %v484 = vsub.f32 %v482, %v483
        %v485 = vand.u32 %v484, 4294901760
        %486 = vmatpush1.msra.mxu0 %v485
        %487 = vmatprep.subr.mxu0 0.0
        %v488 = vand.u32 %v265, 4294901760
        %v489 = vsub.f32 %v265, %v488
        %v490 = vand.u32 %v489, 4294901760
        %v491 = vsub.f32 %v489, %v490
        %v492 = vand.u32 %v491, 4294901760
        %493 = vmatpush1.msra.mxu0 %v492
        %494 = vmatprep.subr.mxu0 0.0
        %495 = vmatpush2.msra.mxu0 0.0
        %496 = vmatprep.subr.mxu0 0.0
        %497 = vmatpush2.msra.mxu0 0.0
        %498 = vmatprep.subr.mxu0 0.0
        %499 = vmatpush2.msra.mxu0 0.0
        %500 = vmatprep.subr.mxu0 0.0
        %501 = vmatpush2.msra.mxu0 0.0
        %502 = vmatprep.subr.mxu0 0.0
        %503 = vmatpush2.msra.mxu0 0.0
        %504 = vmatprep.subr.mxu0 0.0
        %505 = vmatpush2.msra.mxu0 0.0
        %506 = vmatprep.subr.mxu0 0.0
        %507 = vmatpush2.msra.mxu0 0.0
        %508 = vmatprep.subr.mxu0 0.0
        %509 = vmatpush2.msra.mxu0 0.0
        %510 = vmatprep.subr.mxu0 0.0
        %511 = vmatpush2.msra.mxu0 0.0
        %512 = vmatprep.subr.mxu0 0.0
        %513 = vmatpush2.msra.mxu0 0.0
        %514 = vmatprep.subr.mxu0 0.0
        %515 = vmatpush2.msra.mxu0 0.0
        %516 = vmatprep.subr.mxu0 0.0
        %517 = vmatpush2.msra.mxu0 0.0
        %518 = vmatprep.subr.mxu0 0.0
        %519 = vmatpush2.msra.mxu0 0.0
        %520 = vmatprep.subr.mxu0 0.0
        %521 = vmatpush2.msra.mxu0 0.0
        %522 = vmatprep.subr.mxu0 0.0
        %523 = vmatpush2.msra.mxu0 0.0
        %524 = vmatprep.subr.mxu0 0.0
        %525 = vmatpush2.msra.mxu0 0.0
        %526 = vmatprep.mubr.f32.mxu0 0.0
        %v527 = vand.u32 %v263, 4294901760
        %528 = vmatmul.mubr.f32.gmra.mxu0 %v527
        %v529 = vpop.f32.mrf.mxu0
        %v530 = vadd.f32 %v369, %v529
        %v531 = vpop.f32.mrf.mxu0
        %532 = vmatprep.mubr.f32.mxu0 0.0
        %v533 = vand.u32 %v264, 4294901760
        %534 = vmatmul.mubr.f32.gmra.mxu0 %v533
        %v535 = vpop.f32.mrf.mxu0
        %v536 = vadd.f32 %v379, %v535
        %v537 = vpop.f32.mrf.mxu0
        %538 = vdwg.mxu0
        %539 = vmatprep.subr.mxu0 0.0
        %v540 = vand.u32 %v280, 4294901760
        %v541 = vsub.f32 %v280, %v540
        %542 = vmatpush1.msra.mxu0 %v541
        %543 = vmatprep.subr.mxu0 0.0
        %v544 = vand.u32 %v279, 4294901760
        %v545 = vsub.f32 %v279, %v544
        %546 = vmatpush1.msra.mxu0 %v545
        %547 = vmatprep.subr.mxu0 0.0
        %v548 = vand.u32 %v278, 4294901760
        %v549 = vsub.f32 %v278, %v548
        %550 = vmatpush1.msra.mxu0 %v549
        %551 = vmatprep.subr.mxu0 0.0
        %v552 = vand.u32 %v277, 4294901760
        %v553 = vsub.f32 %v277, %v552
        %554 = vmatpush1.msra.mxu0 %v553
        %555 = vmatprep.subr.mxu0 0.0
        %v556 = vand.u32 %v276, 4294901760
        %v557 = vsub.f32 %v276, %v556
        %558 = vmatpush1.msra.mxu0 %v557
        %559 = vmatprep.subr.mxu0 0.0
        %v560 = vand.u32 %v275, 4294901760
        %v561 = vsub.f32 %v275, %v560
        %562 = vmatpush1.msra.mxu0 %v561
        %563 = vmatprep.subr.mxu0 0.0
        %v564 = vand.u32 %v274, 4294901760
        %v565 = vsub.f32 %v274, %v564
        %566 = vmatpush1.msra.mxu0 %v565
        %567 = vmatprep.subr.mxu0 0.0
        %v568 = vand.u32 %v273, 4294901760
        %v569 = vsub.f32 %v273, %v568
        %570 = vmatpush1.msra.mxu0 %v569
        %571 = vmatprep.subr.mxu0 0.0
        %v572 = vand.u32 %v272, 4294901760
        %v573 = vsub.f32 %v272, %v572
        %574 = vmatpush1.msra.mxu0 %v573
        %575 = vmatprep.subr.mxu0 0.0
        %v576 = vand.u32 %v271, 4294901760
        %v577 = vsub.f32 %v271, %v576
        %578 = vmatpush1.msra.mxu0 %v577
        %579 = vmatprep.subr.mxu0 0.0
        %v580 = vand.u32 %v270, 4294901760
        %v581 = vsub.f32 %v270, %v580
        %582 = vmatpush1.msra.mxu0 %v581
        %583 = vmatprep.subr.mxu0 0.0
        %v584 = vand.u32 %v269, 4294901760
        %v585 = vsub.f32 %v269, %v584
        %586 = vmatpush1.msra.mxu0 %v585
        %587 = vmatprep.subr.mxu0 0.0
        %v588 = vand.u32 %v268, 4294901760
        %v589 = vsub.f32 %v268, %v588
        %590 = vmatpush1.msra.mxu0 %v589
        %591 = vmatprep.subr.mxu0 0.0
        %v592 = vand.u32 %v267, 4294901760
        %v593 = vsub.f32 %v267, %v592
        %594 = vmatpush1.msra.mxu0 %v593
        %595 = vmatprep.subr.mxu0 0.0
        %v596 = vand.u32 %v266, 4294901760
        %v597 = vsub.f32 %v266, %v596
        %598 = vmatpush1.msra.mxu0 %v597
        %599 = vmatprep.subr.mxu0 0.0
        %v600 = vand.u32 %v265, 4294901760
        %v601 = vsub.f32 %v265, %v600
        %602 = vmatpush1.msra.mxu0 %v601
        %603 = vmatprep.subr.mxu0 0.0
        %604 = vmatpush2.msra.mxu0 0.0
        %605 = vmatprep.subr.mxu0 0.0
        %606 = vmatpush2.msra.mxu0 0.0
        %607 = vmatprep.subr.mxu0 0.0
        %608 = vmatpush2.msra.mxu0 0.0
        %609 = vmatprep.subr.mxu0 0.0
        %610 = vmatpush2.msra.mxu0 0.0
        %611 = vmatprep.subr.mxu0 0.0
        %612 = vmatpush2.msra.mxu0 0.0
        %613 = vmatprep.subr.mxu0 0.0
        %614 = vmatpush2.msra.mxu0 0.0
        %615 = vmatprep.subr.mxu0 0.0
        %616 = vmatpush2.msra.mxu0 0.0
        %617 = vmatprep.subr.mxu0 0.0
        %618 = vmatpush2.msra.mxu0 0.0
        %619 = vmatprep.subr.mxu0 0.0
        %620 = vmatpush2.msra.mxu0 0.0
        %621 = vmatprep.subr.mxu0 0.0
        %622 = vmatpush2.msra.mxu0 0.0
        %623 = vmatprep.subr.mxu0 0.0
        %624 = vmatpush2.msra.mxu0 0.0
        %625 = vmatprep.subr.mxu0 0.0
        %626 = vmatpush2.msra.mxu0 0.0
        %627 = vmatprep.subr.mxu0 0.0
        %628 = vmatpush2.msra.mxu0 0.0
        %629 = vmatprep.subr.mxu0 0.0
        %630 = vmatpush2.msra.mxu0 0.0
        %631 = vmatprep.subr.mxu0 0.0
        %632 = vmatpush2.msra.mxu0 0.0
        %633 = vmatprep.subr.mxu0 0.0
        %634 = vmatpush2.msra.mxu0 0.0
        %635 = vmatprep.mubr.f32.mxu0 0.0
        %v636 = vand.u32 %v263, 4294901760
        %v637 = vsub.f32 %v263, %v636
        %638 = vmatmul.mubr.f32.gmra.mxu0 %v637
        %v639 = vpop.f32.mrf.mxu0
        %v640 = vadd.f32 %v530, %v639
        %v641 = vpop.f32.mrf.mxu0
        %642 = vmatprep.mubr.f32.mxu0 0.0
        %v643 = vand.u32 %v264, 4294901760
        %v644 = vsub.f32 %v264, %v643
        %645 = vmatmul.mubr.f32.gmra.mxu0 %v644
        %v646 = vpop.f32.mrf.mxu0
        %v647 = vadd.f32 %v536, %v646
        %v648 = vpop.f32.mrf.mxu0
        %649 = vdwg.mxu0
        %650 = vmatprep.subr.mxu0 0.0
        %v651 = vand.u32 %v280, 4294901760
        %652 = vmatpush1.msra.mxu0 %v651
        %653 = vmatprep.subr.mxu0 0.0
        %v654 = vand.u32 %v279, 4294901760
        %655 = vmatpush1.msra.mxu0 %v654
        %656 = vmatprep.subr.mxu0 0.0
        %v657 = vand.u32 %v278, 4294901760
        %658 = vmatpush1.msra.mxu0 %v657
        %659 = vmatprep.subr.mxu0 0.0
        %v660 = vand.u32 %v277, 4294901760
        %661 = vmatpush1.msra.mxu0 %v660
        %662 = vmatprep.subr.mxu0 0.0
        %v663 = vand.u32 %v276, 4294901760
        %664 = vmatpush1.msra.mxu0 %v663
        %665 = vmatprep.subr.mxu0 0.0
        %v666 = vand.u32 %v275, 4294901760
        %667 = vmatpush1.msra.mxu0 %v666
        %668 = vmatprep.subr.mxu0 0.0
        %v669 = vand.u32 %v274, 4294901760
        %670 = vmatpush1.msra.mxu0 %v669
        %671 = vmatprep.subr.mxu0 0.0
        %v672 = vand.u32 %v273, 4294901760
        %673 = vmatpush1.msra.mxu0 %v672
        %674 = vmatprep.subr.mxu0 0.0
        %v675 = vand.u32 %v272, 4294901760
        %676 = vmatpush1.msra.mxu0 %v675
        %677 = vmatprep.subr.mxu0 0.0
        %v678 = vand.u32 %v271, 4294901760
        %679 = vmatpush1.msra.mxu0 %v678
        %680 = vmatprep.subr.mxu0 0.0
        %v681 = vand.u32 %v270, 4294901760
        %682 = vmatpush1.msra.mxu0 %v681
        %683 = vmatprep.subr.mxu0 0.0
        %v684 = vand.u32 %v269, 4294901760
        %685 = vmatpush1.msra.mxu0 %v684
        %686 = vmatprep.subr.mxu0 0.0
        %v687 = vand.u32 %v268, 4294901760
        %688 = vmatpush1.msra.mxu0 %v687
        %689 = vmatprep.subr.mxu0 0.0
        %v690 = vand.u32 %v267, 4294901760
        %691 = vmatpush1.msra.mxu0 %v690
        %692 = vmatprep.subr.mxu0 0.0
        %v693 = vand.u32 %v266, 4294901760
        %694 = vmatpush1.msra.mxu0 %v693
        %695 = vmatprep.subr.mxu0 0.0
        %v696 = vand.u32 %v265, 4294901760
        %697 = vmatpush1.msra.mxu0 %v696
        %698 = vmatprep.subr.mxu0 0.0
        %699 = vmatpush2.msra.mxu0 0.0
        %700 = vmatprep.subr.mxu0 0.0
        %701 = vmatpush2.msra.mxu0 0.0
        %702 = vmatprep.subr.mxu0 0.0
        %703 = vmatpush2.msra.mxu0 0.0
        %704 = vmatprep.subr.mxu0 0.0
        %705 = vmatpush2.msra.mxu0 0.0
        %706 = vmatprep.subr.mxu0 0.0
        %707 = vmatpush2.msra.mxu0 0.0
        %708 = vmatprep.subr.mxu0 0.0
        %709 = vmatpush2.msra.mxu0 0.0
        %710 = vmatprep.subr.mxu0 0.0
        %711 = vmatpush2.msra.mxu0 0.0
        %712 = vmatprep.subr.mxu0 0.0
        %713 = vmatpush2.msra.mxu0 0.0
        %714 = vmatprep.subr.mxu0 0.0
        %715 = vmatpush2.msra.mxu0 0.0
        %716 = vmatprep.subr.mxu0 0.0
        %717 = vmatpush2.msra.mxu0 0.0
        %718 = vmatprep.subr.mxu0 0.0
        %719 = vmatpush2.msra.mxu0 0.0
        %720 = vmatprep.subr.mxu0 0.0
        %721 = vmatpush2.msra.mxu0 0.0
        %722 = vmatprep.subr.mxu0 0.0
        %723 = vmatpush2.msra.mxu0 0.0
        %724 = vmatprep.subr.mxu0 0.0
        %725 = vmatpush2.msra.mxu0 0.0
        %726 = vmatprep.subr.mxu0 0.0
        %727 = vmatpush2.msra.mxu0 0.0
        %728 = vmatprep.subr.mxu0 0.0
        %729 = vmatpush2.msra.mxu0 0.0
        %730 = vmatprep.mubr.f32.mxu0 0.0
        %v731 = vand.u32 %v263, 4294901760
        %v732 = vsub.f32 %v263, %v731
        %v733 = vand.u32 %v732, 4294901760
        %734 = vmatmul.mubr.f32.gmra.mxu0 %v733
        %v735 = vpop.f32.mrf.mxu0
        %v736 = vadd.f32 %v640, %v735
        %v737 = vpop.f32.mrf.mxu0
        %738 = vmatprep.mubr.f32.mxu0 0.0
        %v739 = vand.u32 %v264, 4294901760
        %v740 = vsub.f32 %v264, %v739
        %v741 = vand.u32 %v740, 4294901760
        %742 = vmatmul.mubr.f32.gmra.mxu0 %v741
        %v743 = vpop.f32.mrf.mxu0
        %v744 = vadd.f32 %v647, %v743
        %v745 = vpop.f32.mrf.mxu0
        %746 = vdwg.mxu0
        %747 = vmatprep.subr.mxu0 0.0
        %v748 = vand.u32 %v280, 4294901760
        %v749 = vsub.f32 %v280, %v748
        %v750 = vand.u32 %v749, 4294901760
        %751 = vmatpush1.msra.mxu0 %v750
        %752 = vmatprep.subr.mxu0 0.0
        %v753 = vand.u32 %v279, 4294901760
        %v754 = vsub.f32 %v279, %v753
        %v755 = vand.u32 %v754, 4294901760
        %756 = vmatpush1.msra.mxu0 %v755
        %757 = vmatprep.subr.mxu0 0.0
        %v758 = vand.u32 %v278, 4294901760
        %v759 = vsub.f32 %v278, %v758
        %v760 = vand.u32 %v759, 4294901760
        %761 = vmatpush1.msra.mxu0 %v760
        %762 = vmatprep.subr.mxu0 0.0
        %v763 = vand.u32 %v277, 4294901760
        %v764 = vsub.f32 %v277, %v763
        %v765 = vand.u32 %v764, 4294901760
        %766 = vmatpush1.msra.mxu0 %v765
        %767 = vmatprep.subr.mxu0 0.0
        %v768 = vand.u32 %v276, 4294901760
        %v769 = vsub.f32 %v276, %v768
        %v770 = vand.u32 %v769, 4294901760
        %771 = vmatpush1.msra.mxu0 %v770
        %772 = vmatprep.subr.mxu0 0.0
        %v773 = vand.u32 %v275, 4294901760
        %v774 = vsub.f32 %v275, %v773
        %v775 = vand.u32 %v774, 4294901760
        %776 = vmatpush1.msra.mxu0 %v775
        %777 = vmatprep.subr.mxu0 0.0
        %v778 = vand.u32 %v274, 4294901760
        %v779 = vsub.f32 %v274, %v778
        %v780 = vand.u32 %v779, 4294901760
        %781 = vmatpush1.msra.mxu0 %v780
        %782 = vmatprep.subr.mxu0 0.0
        %v783 = vand.u32 %v273, 4294901760
        %v784 = vsub.f32 %v273, %v783
        %v785 = vand.u32 %v784, 4294901760
        %786 = vmatpush1.msra.mxu0 %v785
        %787 = vmatprep.subr.mxu0 0.0
        %v788 = vand.u32 %v272, 4294901760
        %v789 = vsub.f32 %v272, %v788
        %v790 = vand.u32 %v789, 4294901760
        %791 = vmatpush1.msra.mxu0 %v790
        %792 = vmatprep.subr.mxu0 0.0
        %v793 = vand.u32 %v271, 4294901760
        %v794 = vsub.f32 %v271, %v793
        %v795 = vand.u32 %v794, 4294901760
        %796 = vmatpush1.msra.mxu0 %v795
        %797 = vmatprep.subr.mxu0 0.0
        %v798 = vand.u32 %v270, 4294901760
        %v799 = vsub.f32 %v270, %v798
        %v800 = vand.u32 %v799, 4294901760
        %801 = vmatpush1.msra.mxu0 %v800
        %802 = vmatprep.subr.mxu0 0.0
        %v803 = vand.u32 %v269, 4294901760
        %v804 = vsub.f32 %v269, %v803
        %v805 = vand.u32 %v804, 4294901760
        %806 = vmatpush1.msra.mxu0 %v805
        %807 = vmatprep.subr.mxu0 0.0
        %v808 = vand.u32 %v268, 4294901760
        %v809 = vsub.f32 %v268, %v808
        %v810 = vand.u32 %v809, 4294901760
        %811 = vmatpush1.msra.mxu0 %v810
        %812 = vmatprep.subr.mxu0 0.0
        %v813 = vand.u32 %v267, 4294901760
        %v814 = vsub.f32 %v267, %v813
        %v815 = vand.u32 %v814, 4294901760
        %816 = vmatpush1.msra.mxu0 %v815
        %817 = vmatprep.subr.mxu0 0.0
        %v818 = vand.u32 %v266, 4294901760
        %v819 = vsub.f32 %v266, %v818
        %v820 = vand.u32 %v819, 4294901760
        %821 = vmatpush1.msra.mxu0 %v820
        %822 = vmatprep.subr.mxu0 0.0
        %v823 = vand.u32 %v265, 4294901760
        %v824 = vsub.f32 %v265, %v823
        %v825 = vand.u32 %v824, 4294901760
        %826 = vmatpush1.msra.mxu0 %v825
        %827 = vmatprep.subr.mxu0 0.0
        %828 = vmatpush2.msra.mxu0 0.0
        %829 = vmatprep.subr.mxu0 0.0
        %830 = vmatpush2.msra.mxu0 0.0
        %831 = vmatprep.subr.mxu0 0.0
        %832 = vmatpush2.msra.mxu0 0.0
        %833 = vmatprep.subr.mxu0 0.0
        %834 = vmatpush2.msra.mxu0 0.0
        %835 = vmatprep.subr.mxu0 0.0
        %836 = vmatpush2.msra.mxu0 0.0
        %837 = vmatprep.subr.mxu0 0.0
        %838 = vmatpush2.msra.mxu0 0.0
        %839 = vmatprep.subr.mxu0 0.0
        %840 = vmatpush2.msra.mxu0 0.0
        %841 = vmatprep.subr.mxu0 0.0
        %842 = vmatpush2.msra.mxu0 0.0
        %843 = vmatprep.subr.mxu0 0.0
        %844 = vmatpush2.msra.mxu0 0.0
        %845 = vmatprep.subr.mxu0 0.0
        %846 = vmatpush2.msra.mxu0 0.0
        %847 = vmatprep.subr.mxu0 0.0
        %848 = vmatpush2.msra.mxu0 0.0
        %849 = vmatprep.subr.mxu0 0.0
        %850 = vmatpush2.msra.mxu0 0.0
        %851 = vmatprep.subr.mxu0 0.0
        %852 = vmatpush2.msra.mxu0 0.0
        %853 = vmatprep.subr.mxu0 0.0
        %854 = vmatpush2.msra.mxu0 0.0
        %855 = vmatprep.subr.mxu0 0.0
        %856 = vmatpush2.msra.mxu0 0.0
        %857 = vmatprep.subr.mxu0 0.0
        %858 = vmatpush2.msra.mxu0 0.0
        %859 = vmatprep.mubr.f32.mxu0 0.0
        %v860 = vand.u32 %v263, 4294901760
        %861 = vmatmul.mubr.f32.gmra.mxu0 %v860
        %v862 = vpop.f32.mrf.mxu0
        %v863 = vadd.f32 %v736, %v862
        %v864 = vpop.f32.mrf.mxu0
        %865 = vmatprep.mubr.f32.mxu0 0.0
        %v866 = vand.u32 %v264, 4294901760
        %867 = vmatmul.mubr.f32.gmra.mxu0 %v866
        %v868 = vpop.f32.mrf.mxu0
        %v869 = vadd.f32 %v744, %v868
        %v870 = vpop.f32.mrf.mxu0
        %871 = vdwg.mxu0
        %872 = vmatprep.subr.mxu0 0.0
        %v873 = vand.u32 %v280, 4294901760
        %874 = vmatpush1.msra.mxu0 %v873
        %875 = vmatprep.subr.mxu0 0.0
        %v876 = vand.u32 %v279, 4294901760
        %877 = vmatpush1.msra.mxu0 %v876
        %878 = vmatprep.subr.mxu0 0.0
        %v879 = vand.u32 %v278, 4294901760
        %880 = vmatpush1.msra.mxu0 %v879
        %881 = vmatprep.subr.mxu0 0.0
        %v882 = vand.u32 %v277, 4294901760
        %883 = vmatpush1.msra.mxu0 %v882
        %884 = vmatprep.subr.mxu0 0.0
        %v885 = vand.u32 %v276, 4294901760
        %886 = vmatpush1.msra.mxu0 %v885
        %887 = vmatprep.subr.mxu0 0.0
        %v888 = vand.u32 %v275, 4294901760
        %889 = vmatpush1.msra.mxu0 %v888
        %890 = vmatprep.subr.mxu0 0.0
        %v891 = vand.u32 %v274, 4294901760
        %892 = vmatpush1.msra.mxu0 %v891
        %893 = vmatprep.subr.mxu0 0.0
        %v894 = vand.u32 %v273, 4294901760
        %895 = vmatpush1.msra.mxu0 %v894
        %896 = vmatprep.subr.mxu0 0.0
        %v897 = vand.u32 %v272, 4294901760
        %898 = vmatpush1.msra.mxu0 %v897
        %899 = vmatprep.subr.mxu0 0.0
        %v900 = vand.u32 %v271, 4294901760
        %901 = vmatpush1.msra.mxu0 %v900
        %902 = vmatprep.subr.mxu0 0.0
        %v903 = vand.u32 %v270, 4294901760
        %904 = vmatpush1.msra.mxu0 %v903
        %905 = vmatprep.subr.mxu0 0.0
        %v906 = vand.u32 %v269, 4294901760
        %907 = vmatpush1.msra.mxu0 %v906
        %908 = vmatprep.subr.mxu0 0.0
        %v909 = vand.u32 %v268, 4294901760
        %910 = vmatpush1.msra.mxu0 %v909
        %911 = vmatprep.subr.mxu0 0.0
        %v912 = vand.u32 %v267, 4294901760
        %913 = vmatpush1.msra.mxu0 %v912
        %914 = vmatprep.subr.mxu0 0.0
        %v915 = vand.u32 %v266, 4294901760
        %916 = vmatpush1.msra.mxu0 %v915
        %917 = vmatprep.subr.mxu0 0.0
        %v918 = vand.u32 %v265, 4294901760
        %919 = vmatpush1.msra.mxu0 %v918
        %920 = vmatprep.subr.mxu0 0.0
        %921 = vmatpush2.msra.mxu0 0.0
        %922 = vmatprep.subr.mxu0 0.0
        %923 = vmatpush2.msra.mxu0 0.0
        %924 = vmatprep.subr.mxu0 0.0
        %925 = vmatpush2.msra.mxu0 0.0
        %926 = vmatprep.subr.mxu0 0.0
        %927 = vmatpush2.msra.mxu0 0.0
        %928 = vmatprep.subr.mxu0 0.0
        %929 = vmatpush2.msra.mxu0 0.0
        %930 = vmatprep.subr.mxu0 0.0
        %931 = vmatpush2.msra.mxu0 0.0
        %932 = vmatprep.subr.mxu0 0.0
        %933 = vmatpush2.msra.mxu0 0.0
        %934 = vmatprep.subr.mxu0 0.0
        %935 = vmatpush2.msra.mxu0 0.0
        %936 = vmatprep.subr.mxu0 0.0
        %937 = vmatpush2.msra.mxu0 0.0
        %938 = vmatprep.subr.mxu0 0.0
        %939 = vmatpush2.msra.mxu0 0.0
        %940 = vmatprep.subr.mxu0 0.0
        %941 = vmatpush2.msra.mxu0 0.0
        %942 = vmatprep.subr.mxu0 0.0
        %943 = vmatpush2.msra.mxu0 0.0
        %944 = vmatprep.subr.mxu0 0.0
        %945 = vmatpush2.msra.mxu0 0.0
        %946 = vmatprep.subr.mxu0 0.0
        %947 = vmatpush2.msra.mxu0 0.0
        %948 = vmatprep.subr.mxu0 0.0
        %949 = vmatpush2.msra.mxu0 0.0
        %950 = vmatprep.subr.mxu0 0.0
        %951 = vmatpush2.msra.mxu0 0.0
        %952 = vmatprep.mubr.f32.mxu0 0.0
        %v953 = vand.u32 %v263, 4294901760
        %954 = vmatmul.mubr.f32.gmra.mxu0 %v953
        %v955 = vpop.f32.mrf.mxu0
        %v956 = vadd.f32 %v863, %v955
        %v957 = vpop.f32.mrf.mxu0
        %958 = vmatprep.mubr.f32.mxu0 0.0
        %v959 = vand.u32 %v264, 4294901760
        %960 = vmatmul.mubr.f32.gmra.mxu0 %v959
        %v961 = vpop.f32.mrf.mxu0
        %v962 = vadd.f32 %v869, %v961
        %v963 = vpop.f32.mrf.mxu0
        %964 = vdwg.mxu0
        %965 = vst [vmem:[%s171] sm:$0xff] %v956
        %966 = vst [vmem:[%s171 + $0x8] sm:$0xff] %v962
        %s967 = sand.u32 %s79, 1
        %s968 = scalar_lea.sflag [#allocation6], %s967
        %s969 = sand.u32 %s79, 1
        %s970 = smul.addr %s969, 16
        %s971 = scalar_lea.vmem [#allocation7], %s970
        // Predicated region
        $region33: #{tpu_custom_call.1} parent=27 // pred_check
          %p972 = pneg %p89
        $region34: #{tpu_custom_call.1} parent=27 // pred_check_branch
          %974 = sbr.rel (%p972) target = $region36
        $region35: #{tpu_custom_call.1} parent=27 // pred_region
          %s975 = smul.u32 2, %s24
          %s976 = ssub.s32 5, %s975
          %p977 = scmp.lt.s32.totalorder %s976, 2
          %s978 = scalar_select %p977, %s976, 2
          %s979 = smul.u32 128, %s978
          %s981 = ssub.s32 256, %s979
          %982 = vsyncadd %s968, %s981
          %p983 = scmp.ne.s32.totalorder 0, %s979
          %s984 = smul.addr %s975, 128
          %s985 = scalar_lea.hbm %s3, %s984
          %s986 = smul.u32 8, %s978
          %s987 = sshll.u32 %s971, 4
          %s988 = int_to_ptr.vmem [resolvable:$true] %s987
          %s989 = sshll.u32 %s986, 4
          %993 = dma.vmem_to_hbm [thread:$0]  (%p983), %s988, %s989, %s985, %s968, 128, 128, 8
        $region36: #{tpu_custom_call.1} parent=27 // pred_fallthru
          _
      $region28: #{tpu_custom_call.1} parent=5 // pred_fallthru
        _
      %p994 = scmp.le.s32.totalorder 2, %s19
      // Predicated region
      $region37: #{tpu_custom_call.1} parent=5 // pred_check
        %p995 = pneg %p994
      $region38: #{tpu_custom_call.1} parent=5 // pred_check_branch
        %997 = sbr.rel (%p995) target = $region40
      $region39: #{tpu_custom_call.1} parent=5 // pred_region
        %s998 = ssub.s32 %s19, 2
        // Predicated region
        $region41: #{tpu_custom_call.1} parent=39 // pred_check
          %p999 = pneg %p95
        $region42: #{tpu_custom_call.1} parent=39 // pred_check_branch
          %1001 = sbr.rel (%p999) target = $region44
        $region43: #{tpu_custom_call.1} parent=39 // pred_region
          %s1002 = sand.u32 %s80, 1
          %s1003 = scalar_lea.sflag [#allocation6], %s1002
          %s1004 = sand.u32 %s80, 1
          %s1005 = smul.addr %s1004, 16
          %s1006 = scalar_lea.vmem [#allocation7], %s1005
          %1007 = dma.done %s1003, 256
        $region44: #{tpu_custom_call.1} parent=39 // pred_fallthru
          _
      $region40: #{tpu_custom_call.1} parent=5 // pred_fallthru
        _
    $region6: #{tpu_custom_call.1} parent=1 // loop_footer
      %s23 = sadd.s32 1, %s19
    $region7: #{tpu_custom_call.1} parent=1 // loop_footer_branch
      %18 = sbr.rel target = $region3
    $region8: #{tpu_custom_call.1} parent=1 // loop_exit
      _
    %1008 = vsyncpa [#allocation5], 1
    %s1009 = scalar_lea.sflag [#allocation5], 1
    %1010 = vsyncpa %s1009, 1
    %1011 = vsyncpa [#allocation6], 1
    %s1012 = scalar_lea.sflag [#allocation6], 1
    %1013 = vsyncpa %s1012, 1

</llo_original>
